<compile_context>
chip_gen: v7x
topology: tpu7x:2x2x1
jax: 0.10.0
libtpu: 0.0.40
codegen_flags: <defaults>
</compile_context>

<pallas_src>
import math

import jax
import jax.numpy as jnp
from jax.experimental import pallas as pl
from jax.experimental.pallas import tpu as pltpu


def _round_up(x, m):
    return (x + m - 1) // m * m


def _make_gcn_kernel(has_bias, use_acc_scratch, compute_dtype):
    """Fused kernel: out[i] (+)= adj[i, kidx] @ (X[kidx] @ W)  (+ bias once)."""
    cdt = compute_dtype

    def kernel(kidx_ref, count_ref, x_ref, w_ref, adj_ref, *rest):
        pos = 0
        bias_ref = None
        if has_bias:
            bias_ref = rest[pos]
            pos += 1
        out_ref = rest[pos]
        pos += 1
        acc_ref = rest[pos] if use_acc_scratch else out_ref

        i = pl.program_id(0)
        j = pl.program_id(1)
        nk = pl.num_programs(1)

        @pl.when(j == 0)
        def _init():
            if has_bias:
                acc_ref[...] = (jnp.zeros_like(acc_ref)
                                + bias_ref[...].astype(acc_ref.dtype))
            else:
                acc_ref[...] = jnp.zeros_like(acc_ref)

        # Only real (nonzero) adjacency blocks do MXU work; skipped tail steps
        # also issue no DMA because their block index repeats the last one.
        @pl.when(j < count_ref[i])
        def _accumulate():
            sup = jnp.dot(x_ref[...].astype(cdt), w_ref[...],
                          preferred_element_type=jnp.float32).astype(cdt)
            acc_ref[...] += jnp.dot(adj_ref[...].astype(cdt), sup,
                                    preferred_element_type=jnp.float32)

        if use_acc_scratch:
            @pl.when(j == nk - 1)
            def _finalize():
                out_ref[...] = acc_ref[...].astype(out_ref.dtype)

    return kernel


def _select_tiles(n_pad, f_pad, in_feat, adj_itemsize, cdt_itemsize,
                  out_itemsize, budget_bytes=12 * 2**20):
    """Pick (tm, tk) fitting a conservative VMEM budget; keep ni >= 2 if possible."""
    tm_cap = 128 if n_pad <= 128 else n_pad // 2   # feed both v7x TensorCores

    def footprint(tm, tk):
        return (2 * tm * tk * adj_itemsize            # adj tiles (double buffered)
                + 2 * tk * in_feat * cdt_itemsize     # X k-tiles
                + 2 * in_feat * f_pad * cdt_itemsize  # W (VMEM resident)
                + 2 * f_pad * 4                       # bias
                + 2 * tm * f_pad * out_itemsize       # output block
                + tm * f_pad * 4)                     # worst-case f32 accumulator

    for tm in (512, 256, 128):
        if tm > tm_cap or n_pad % tm:
            continue
        for tk in (512, 256, 128):
            if n_pad % tk:
                continue
            if footprint(tm, tk) <= budget_bytes:
                return tm, tk, footprint(tm, tk)
    return 128, 128, footprint(128, 128)


def graph_convolution(node_feat, adj, weight, bias=None, *,
                      compute_dtype=jnp.bfloat16,
                      detect_block_sparsity=False):
    """Pallas GCN forward.

    node_feat: [n_node, in_feature]
    adj:       [n_node, n_node]   (dense layout; torch.spmm sparsity is
                                   approximated by block-level DMA skipping)
    weight:    [in_feature, out_feature]
    bias:      [out_feature] or None
    returns:   [n_node, out_feature]  in node_feat.dtype
    """
    n_node, in_feat = node_feat.shape
    out_feat = weight.shape[1]
    assert weight.shape[0] == in_feat
    assert adj.shape == (n_node, n_node)
    out_dtype = jnp.dtype(node_feat.dtype)
    cdt = jnp.dtype(compute_dtype)

    n_pad = _round_up(n_node, 128)
    f_pad = _round_up(out_feat, 128)

    # adj is the roofline operand: avoid any wrapper-side N^2 pass when it is
    # already 128-aligned (cast happens per-tile in VMEM inside the kernel).
    if n_node == n_pad:
        adj_p = adj
    else:
        adj_p = jnp.zeros((n_pad, n_pad), cdt).at[:n_node, :n_node].set(
            adj.astype(cdt))
    adj_itemsize = jnp.dtype(adj_p.dtype).itemsize

    # Small operands: pad + cast in the wrapper (negligible traffic).
    x_p = jnp.zeros((n_pad, in_feat), cdt).at[:n_node, :].set(
        node_feat.astype(cdt))
    w_p = jnp.zeros((in_feat, f_pad), cdt).at[:, :out_feat].set(
        weight.astype(cdt))

    tm, tk, vmem_est = _select_tiles(n_pad, f_pad, in_feat, adj_itemsize,
                                     cdt.itemsize, out_dtype.itemsize)
    ni, nk = n_pad // tm, n_pad // tk

    # ---- compacted nonzero-block schedule (skips adj DMA + MXU work) -------
    if detect_block_sparsity:
        # NOTE: this is one full N^2 pass over adj; callers reusing adj across
        # layers/steps should compute the schedule once and cache it.
        mask = (jnp.abs(adj_p.astype(jnp.float32))
                .reshape(ni, tm, nk, tk).sum(axis=(1, 3)) > 0)
        count = mask.sum(axis=1).astype(jnp.int32)
        col = jnp.arange(nk, dtype=jnp.int32)
        order = jnp.argsort(jnp.where(mask, col, col + nk),
                            axis=1).astype(jnp.int32)
        last = jnp.take_along_axis(order,
                                   jnp.maximum(count - 1, 0)[:, None], axis=1)
        # Tail entries repeat the last valid block index -> unchanged block
        # index -> Pallas issues no DMA for skipped steps.
        kidx2d = jnp.where(col[None, :] < count[:, None], order, last)
    else:
        kidx2d = jnp.broadcast_to(jnp.arange(nk, dtype=jnp.int32), (ni, nk))
        count = jnp.full((ni,), nk, dtype=jnp.int32)
    kidx = kidx2d.reshape(ni * nk).astype(jnp.int32)

    has_bias = bias is not None
    use_acc_scratch = (out_dtype != jnp.float32)

    in_specs = [
        # X k-tile (fused support computation)
        pl.BlockSpec((tk, in_feat), lambda i, j, kx, cnt: (kx[i * nk + j], 0)),
        # W: constant block index -> DMA'd once, VMEM resident
        pl.BlockSpec((in_feat, f_pad), lambda i, j, kx, cnt: (0, 0)),
        # adj tile, data-dependent column index
        pl.BlockSpec((tm, tk), lambda i, j, kx, cnt: (i, kx[i * nk + j])),
    ]
    operands = [x_p, w_p, adj_p]
    if has_bias:
        b_p = jnp.zeros((1, f_pad), jnp.float32).at[0, :out_feat].set(
            bias.astype(jnp.float32))
        in_specs.append(pl.BlockSpec((1, f_pad), lambda i, j, kx, cnt: (0, 0)))
        operands.append(b_p)

    scratch_shapes = ([pltpu.VMEM((tm, f_pad), jnp.float32)]
                      if use_acc_scratch else [])

    vmem_limit = int(min(32 * 2**20, max(2 * vmem_est, 8 * 2**20)))

    cost = pl.CostEstimate(
        flops=2 * n_pad * n_pad * f_pad + 2 * ni * n_pad * in_feat * f_pad,
        transcendentals=0,
        bytes_accessed=(n_pad * n_pad * adj_itemsize           # adj read once
                        + ni * n_pad * in_feat * cdt.itemsize  # X re-reads
                        + in_feat * f_pad * cdt.itemsize       # W
                        + (f_pad * 4 if has_bias else 0)
                        + n_pad * f_pad * out_dtype.itemsize), # output
    )

    out_p = pl.pallas_call(
        _make_gcn_kernel(has_bias, use_acc_scratch, cdt),
        out_shape=jax.ShapeDtypeStruct((n_pad, f_pad), out_dtype),
        grid_spec=pltpu.PrefetchScalarGridSpec(
            num_scalar_prefetch=2,
            grid=(ni, nk),
            in_specs=in_specs,
            out_specs=pl.BlockSpec((tm, f_pad), lambda i, j, kx, cnt: (i, 0)),
            scratch_shapes=scratch_shapes,
        ),
        compiler_params=pltpu.CompilerParams(
            dimension_semantics=("parallel", "arbitrary"),
            vmem_limit_bytes=vmem_limit),
        cost_estimate=cost,
    )(kidx, count, *operands)

    return out_p[:n_node, :out_feat]


if __name__ == "__main__":
    key = jax.random.PRNGKey(0)

    # ---- test 1: module-sized demo (N=64, F_in=32, F_out=128), with bias,
    #      f32 compute for a tight check against the f32 reference ------------
    n_node, in_feature, out_feature = 64, 32, 128
    k_node, k_adj, k_w, k_b, key = jax.random.split(key, 5)

    node_feat = jax.random.normal(k_node, (n_node, in_feature), dtype=jnp.float32)
    a = (jax.random.uniform(k_adj, (n_node, n_node)) > 0.7).astype(jnp.float32)
    a = jnp.maximum(a, a.T) + jnp.eye(n_node, dtype=jnp.float32)
    adj = a / jnp.sum(a, axis=1, keepdims=True)

    # reset_parameters(): uniform(-stdv, stdv), stdv = 1/sqrt(out_feature)
    stdv = 1.0 / math.sqrt(out_feature)
    weight = jax.random.uniform(k_w, (in_feature, out_feature),
                                minval=-stdv, maxval=stdv, dtype=jnp.float32)
    bias = jax.random.uniform(k_b, (out_feature,),
                              minval=-stdv, maxval=stdv, dtype=jnp.float32)

    out = jax.block_until_ready(
        graph_convolution(node_feat, adj, weight, bias,
                          compute_dtype=jnp.float32))
    ref = adj @ (node_feat @ weight) + bias[None, :]
    assert out.shape == (n_node, out_feature)
    assert jnp.allclose(out, ref, atol=1e-4, rtol=1e-4), "mismatch (test 1)"

    # ---- test 2: non-aligned shapes exercising padding, multi-tile grid,
    #      block-sparse DMA skipping (count==0 rows included), bias=None ------
    n2, fin2, fout2 = 300, 48, 96
    k_x2, k_a2, k_w2, key = jax.random.split(key, 4)
    x2 = jax.random.normal(k_x2, (n2, fin2), dtype=jnp.float32)
    a2 = (jax.random.uniform(k_a2, (n2, n2)) > 0.8).astype(jnp.float32)
    a2 = jnp.maximum(a2, a2.T) + jnp.eye(n2, dtype=jnp.float32)
    a2 = a2.at[:, 128:256].set(0.0).at[128:256, :].set(0.0)  # empty adj blocks
    adj2 = a2 / jnp.maximum(jnp.sum(a2, axis=1, keepdims=True), 1.0)
    w2 = jax.random.uniform(k_w2, (fin2, fout2), minval=-0.1, maxval=0.1,
                            dtype=jnp.float32)
    ref2 = adj2 @ (x2 @ w2)

    # 2a: f32 compute + block skipping -> tight check of the skip machinery
    out2a = jax.block_until_ready(
        graph_convolution(x2, adj2, w2, bias=None,
                          compute_dtype=jnp.float32,
                          detect_block_sparsity=True))
    assert out2a.shape == (n2, fout2)
    assert jnp.allclose(out2a, ref2, atol=1e-3, rtol=1e-3), "mismatch (test 2a)"

    # 2b: default bf16 compute (f32 accumulation) + block skipping
    out2b = jax.block_until_ready(
        graph_convolution(x2, adj2, w2, bias=None,
                          detect_block_sparsity=True))
    assert out2b.shape == (n2, fout2)
    assert jnp.allclose(out2b, ref2, atol=5e-2, rtol=5e-2), "mismatch (test 2b)"

    print("KERNEL_OK")
</pallas_src>

<mosaic_0001>
module attributes {stable_mosaic.version = 11 : i64} {
  func.func @kernel(%arg0: i32, %arg1: i32, %arg2: memref<1xi32, #tpu.memory_space<smem>>, %arg3: memref<1xi32, #tpu.memory_space<smem>>, %arg4: memref<128x32xf32, #tpu.memory_space<vmem>>, %arg5: memref<32x128xf32, #tpu.memory_space<vmem>>, %arg6: memref<128x128xf32, #tpu.memory_space<vmem>>, %arg7: memref<1x128xf32, #tpu.memory_space<vmem>>, %arg8: memref<128x128xf32, #tpu.memory_space<vmem>>) attributes {dimension_semantics = [#tpu.dimension_semantics<parallel>, #tpu.dimension_semantics<arbitrary>], iteration_bounds = array<i64: 1, 1>, scalar_prefetch = 2 : i64, scratch_operands = 0 : i64, tpu.core_type = #tpu.core_type<tc>, window_params = [{transform_indices = @transform_0, window_bounds = array<i64: 128, 32>}, {pipeline_mode = #tpu.pipeline_mode<synchronous>, transform_indices = @transform_1, window_bounds = array<i64: 32, 128>}, {transform_indices = @transform_2, window_bounds = array<i64: 128, 128>}, {pipeline_mode = #tpu.pipeline_mode<synchronous>, transform_indices = @transform_3, window_bounds = array<i64: 1, 128>}, {transform_indices = @transform_4, window_bounds = array<i64: 128, 128>}]} {
    %c0_i32 = arith.constant 0 : i32
    %0 = arith.cmpi eq, %arg1, %c0_i32 : i32
    %1 = arith.extui %0 : i1 to i32
    %c0_i32_0 = arith.constant 0 : i32
    %2 = arith.cmpi ne, %1, %c0_i32_0 : i32
    scf.if %2 {
      %cst = arith.constant 0.000000e+00 : f32
      %8 = vector.broadcast %cst : f32 to vector<128x128xf32>
      %c0 = arith.constant 0 : index
      %c0_2 = arith.constant 0 : index
      %9 = vector.load %arg7[%c0, %c0_2] : memref<1x128xf32, #tpu.memory_space<vmem>>, vector<1x128xf32>
      %10 = vector.broadcast %9 : vector<1x128xf32> to vector<128x128xf32>
      %11 = arith.addf %8, %10 : vector<128x128xf32>
      %c0_3 = arith.constant 0 : index
      %c0_4 = arith.constant 0 : index
      %12 = vector.load %arg8[%c0_3, %c0_4] : memref<128x128xf32, #tpu.memory_space<vmem>>, vector<128x128xf32>
      tpu.vector_store %arg8[%c0_3, %c0_4], %11 {strides = array<i32>} : memref<128x128xf32, #tpu.memory_space<vmem>>, vector<128x128xf32>,
    } else {
    }
    %3 = arith.index_cast %arg0 : i32 to index
    %4 = memref.load %arg3[%3] : memref<1xi32, #tpu.memory_space<smem>>
    %5 = arith.cmpi slt, %arg1, %4 : i32
    %6 = arith.extui %5 : i1 to i32
    %c0_i32_1 = arith.constant 0 : i32
    %7 = arith.cmpi ne, %6, %c0_i32_1 : i32
    scf.if %7 {
      %c0 = arith.constant 0 : index
      %c0_2 = arith.constant 0 : index
      %8 = vector.load %arg4[%c0, %c0_2] : memref<128x32xf32, #tpu.memory_space<vmem>>, vector<128x32xf32>
      %c0_3 = arith.constant 0 : index
      %c0_4 = arith.constant 0 : index
      %9 = vector.load %arg5[%c0_3, %c0_4] : memref<32x128xf32, #tpu.memory_space<vmem>>, vector<32x128xf32>
      %cst = arith.constant dense<0.000000e+00> : vector<128x128xf32>
      %10 = tpu.matmul %8, %9, %cst {dimension_numbers = #tpu.dot_dimension_numbers<[1], [0], [0], [1], [0, 0, 1, 1], [], []>} : vector<128x32xf32>, vector<32x128xf32>, vector<128x128xf32> -> vector<128x128xf32>
      %c0_5 = arith.constant 0 : index
      %c0_6 = arith.constant 0 : index
      %11 = vector.load %arg8[%c0_5, %c0_6] : memref<128x128xf32, #tpu.memory_space<vmem>>, vector<128x128xf32>
      %c0_7 = arith.constant 0 : index
      %c0_8 = arith.constant 0 : index
      %12 = vector.load %arg6[%c0_7, %c0_8] : memref<128x128xf32, #tpu.memory_space<vmem>>, vector<128x128xf32>
      %cst_9 = arith.constant dense<0.000000e+00> : vector<128x128xf32>
      %13 = tpu.matmul %12, %10, %cst_9 {dimension_numbers = #tpu.dot_dimension_numbers<[1], [0], [0], [1], [0, 0, 1, 1], [], []>} : vector<128x128xf32>, vector<128x128xf32>, vector<128x128xf32> -> vector<128x128xf32>
      %14 = arith.addf %11, %13 : vector<128x128xf32>
      %c0_10 = arith.constant 0 : index
      %c0_11 = arith.constant 0 : index
      %15 = vector.load %arg8[%c0_10, %c0_11] : memref<128x128xf32, #tpu.memory_space<vmem>>, vector<128x128xf32>
      tpu.vector_store %arg8[%c0_10, %c0_11], %14 {strides = array<i32>} : memref<128x128xf32, #tpu.memory_space<vmem>>, vector<128x128xf32>,
    } else {
    }
    return
  }
  func.func @transform_0(%arg0: i32, %arg1: i32, %arg2: memref<1xi32, #tpu.memory_space<smem>>, %arg3: memref<1xi32, #tpu.memory_space<smem>>) -> (i32, i32) {
    %c1_i32 = arith.constant 1 : i32
    %0 = arith.muli %arg0, %c1_i32 : i32
    %1 = arith.addi %0, %arg1 : i32
    %2 = arith.index_cast %1 : i32 to index
    %3 = memref.load %arg2[%2] : memref<1xi32, #tpu.memory_space<smem>>
    %c0_i32 = arith.constant 0 : i32
    %c0_i32_0 = arith.constant 0 : i32
    return %3, %c0_i32 : i32, i32
  }
  func.func @transform_1(%arg0: i32, %arg1: i32, %arg2: memref<1xi32, #tpu.memory_space<smem>>, %arg3: memref<1xi32, #tpu.memory_space<smem>>) -> (i32, i32) {
    %c0_i32 = arith.constant 0 : i32
    %c0_i32_0 = arith.constant 0 : i32
    %c0_i32_1 = arith.constant 0 : i32
    return %c0_i32, %c0_i32_0 : i32, i32
  }
  func.func @transform_2(%arg0: i32, %arg1: i32, %arg2: memref<1xi32, #tpu.memory_space<smem>>, %arg3: memref<1xi32, #tpu.memory_space<smem>>) -> (i32, i32) {
    %c1_i32 = arith.constant 1 : i32
    %0 = arith.muli %arg0, %c1_i32 : i32
    %1 = arith.addi %0, %arg1 : i32
    %2 = arith.index_cast %1 : i32 to index
    %3 = memref.load %arg2[%2] : memref<1xi32, #tpu.memory_space<smem>>
    %c0_i32 = arith.constant 0 : i32
    return %arg0, %3 : i32, i32
  }
  func.func @transform_3(%arg0: i32, %arg1: i32, %arg2: memref<1xi32, #tpu.memory_space<smem>>, %arg3: memref<1xi32, #tpu.memory_space<smem>>) -> (i32, i32) {
    %c0_i32 = arith.constant 0 : i32
    %c0_i32_0 = arith.constant 0 : i32
    %c0_i32_1 = arith.constant 0 : i32
    return %c0_i32, %c0_i32_0 : i32, i32
  }
  func.func @transform_4(%arg0: i32, %arg1: i32, %arg2: memref<1xi32, #tpu.memory_space<smem>>, %arg3: memref<1xi32, #tpu.memory_space<smem>>) -> (i32, i32) {
    %c0_i32 = arith.constant 0 : i32
    %c0_i32_0 = arith.constant 0 : i32
    return %arg0, %c0_i32 : i32, i32
  }
}

</mosaic_0001>

<llo_original>
// kernel: tpu_custom_call.1
$region0: #{tpu_custom_call.1}
  #allocation0 [shape = 'u32[]', space=smem, size = 0x4, offset = 0x4, fixed_abs, tag = 'smem constant byte address 0x4 - core index']
  #allocation1 [shape = 'u32[144,128]{1,0:T(1,128)}', space=vmem, size = 0x12000, scoped, tag = 'internal scratch']
  #allocation2 [shape = 's32[1]{0}', space=sflag, size = 0x4, scoped, tag = 'scoped memory for tpu_custom_call.1']
  #allocation3 [shape = 's32[1]{0:T(128)S(6)}', space=smem, size = 0x200, scoped, tag = 'prefetched SMEM operand 0']
  #allocation4 [shape = 's32[1]{0:T(128)S(6)}', space=smem, size = 0x200, scoped, tag = 'prefetched SMEM operand 1']
  %s0 = inlined_call_operand.<no memory space> [shape: s32[1], index: 0, kind: input, shape index: {}]
  %s1 = inlined_call_operand.<no memory space> [shape: s32[1], index: 1, kind: input, shape index: {}]
  %s2 = inlined_call_operand.vmem [shape: f32[128,32], index: 2, kind: input, shape index: {}]
  %s3 = inlined_call_operand.vmem [shape: f32[32,128], index: 3, kind: input, shape index: {}]
  %s4 = inlined_call_operand.vmem [shape: f32[128,128], index: 4, kind: input, shape index: {}]
  %s5 = inlined_call_operand.vmem [shape: f32[1,128], index: 5, kind: input, shape index: {}]
  %s6 = inlined_call_operand.hbm [shape: f32[128,128], index: 6, kind: output, shape index: {}]
  %s7 = sld [smem:[#allocation0]]
  $region34: #{tpu_custom_call.1} parent=0
    _
  %s9 = ssub.s32 1, %s7
  %s10 = scalar_select 0, %s9, %s7
  %11 = sst [smem:[#allocation3]] %s0
  %12 = sst [smem:[#allocation4]] %s1
  $region1: #{tpu_custom_call.1} parent=0
    #allocation5 [shape = 'u8[65536]{0}', space=vmem, size = 0x10000, scoped, tag = 'output window, operand 0, single buffered']
    #allocation6 [shape = 's32[1]{0}', space=sflag, size = 0x4, scoped, tag = 'scoped memory for tpu_custom_call.1']
    %13 = vsyncpa [#allocation6], 0
    // Predicated region
    $region2: #{tpu_custom_call.1} parent=1 // pred_check
      _
    $region3: #{tpu_custom_call.1} parent=1 // pred_check_branch
      %15 = sbr.rel (0) target = $region5
    $region4: #{tpu_custom_call.1} parent=1 // pred_region
      %s16 = sadd.s32 0, 0
      %s17 = sld [smem:[#allocation3 + %s16]]
      %s18 = smul.u32 16, %s17
      %p19 = scmp.lt.s32.totalorder %s18, 15
      %s20 = scalar_select %p19, %s18, 15
      %s21 = smul.addr %s20, 8
      %s22 = scalar_lea.vmem %s2, %s21
      %s23 = sadd.s32 0, 0
      %s24 = sld [smem:[#allocation3 + %s23]]
      %s25 = smul.u32 16, %s24
    $region5: #{tpu_custom_call.1} parent=1 // pred_fallthru
      _
    // Predicated region
    $region6: #{tpu_custom_call.1} parent=1 // pred_check
      _
    $region7: #{tpu_custom_call.1} parent=1 // pred_check_branch
      %27 = sbr.rel (0) target = $region9
    $region8: #{tpu_custom_call.1} parent=1 // pred_region
      _
    $region9: #{tpu_custom_call.1} parent=1 // pred_fallthru
      _
    // Predicated region
    $region10: #{tpu_custom_call.1} parent=1 // pred_check
      _
    $region11: #{tpu_custom_call.1} parent=1 // pred_check_branch
      %29 = sbr.rel (0) target = $region13
    $region12: #{tpu_custom_call.1} parent=1 // pred_region
      %s30 = sadd.s32 0, 0
      %s31 = sld [smem:[#allocation3 + %s30]]
      %p32 = scmp.lt.s32.totalorder %s31, 0
      %s33 = scalar_select %p32, %s31, 0
      %s34 = smul.addr %s33, 8
      %s35 = scalar_lea.vmem %s4, %s34
      %s36 = sadd.s32 0, 0
      %s37 = sld [smem:[#allocation3 + %s36]]
    $region13: #{tpu_custom_call.1} parent=1 // pred_fallthru
      _
    // Predicated region
    $region14: #{tpu_custom_call.1} parent=1 // pred_check
      _
    $region15: #{tpu_custom_call.1} parent=1 // pred_check_branch
      %39 = sbr.rel (0) target = $region17
    $region16: #{tpu_custom_call.1} parent=1 // pred_region
      _
    $region17: #{tpu_custom_call.1} parent=1 // pred_fallthru
      _
    %s40 = sadd.s32 0, 0
    %s41 = sld [smem:[#allocation3 + %s40]]
    %s42 = smul.u32 16, %s41
    %p43 = scmp.lt.s32.totalorder %s42, 15
    %s44 = scalar_select %p43, %s42, 15
    %s45 = smul.addr %s44, 8
    %s46 = scalar_lea.vmem %s2, %s45
    %s47 = sadd.s32 0, 0
    %s48 = sld [smem:[#allocation3 + %s47]]
    %p49 = scmp.lt.s32.totalorder %s48, 0
    %s50 = scalar_select %p49, %s48, 0
    %s51 = smul.addr %s50, 8
    %s52 = scalar_lea.vmem %s4, %s51
    %s53 = sadd.s32 0, 0
    %s54 = sld [smem:[#allocation3 + %s53]]
    %s55 = smul.u32 16, %s54
    %p56 = scmp.lt.s32.totalorder %s55, 15
    %s57 = scalar_select %p56, %s55, 15
    %s58 = smul.addr %s57, 8
    %s59 = scalar_lea.vmem %s2, %s58
    %s60 = sadd.s32 0, 0
    %s61 = sld [smem:[#allocation3 + %s60]]
    %s62 = smul.u32 16, %s61
    %s63 = sadd.s32 0, 0
    %s64 = sld [smem:[#allocation3 + %s63]]
    %p65 = scmp.lt.s32.totalorder %s64, 0
    %s66 = scalar_select %p65, %s64, 0
    %s67 = smul.addr %s66, 8
    %s68 = scalar_lea.vmem %s4, %s67
    %s69 = sadd.s32 0, 0
    %s70 = sld [smem:[#allocation3 + %s69]]
    %p71 = scmp.eq.s32.totalorder 0, 0
    // Predicated region
    $region18: #{tpu_custom_call.1} parent=1 // pred_check
      %p72 = pneg %p71
    $region19: #{tpu_custom_call.1} parent=1 // pred_check_branch
      %74 = sbr.rel (%p72) target = $region21
    $region20: #{tpu_custom_call.1} parent=1 // pred_region
      %v75 = vld [vmem:[%s5] sm:$0x1]
      %v77 = vlaneseq
      %v78 = vshrl.u32 %v77, 7
      %v79 = vsub.s32 0, %v78
      %v80 = vrot.slane %v75, %v79
      %v82 = vadd.f32 %v80, 0.0
      %83 = vst [vmem:[#allocation5] sm:$0xff] %v82
      %84 = vst [vmem:[#allocation5 + $0x8] sm:$0xff] %v82
      %85 = vst [vmem:[#allocation5 + $0x10] sm:$0xff] %v82
      %86 = vst [vmem:[#allocation5 + $0x18] sm:$0xff] %v82
      %87 = vst [vmem:[#allocation5 + $0x20] sm:$0xff] %v82
      %88 = vst [vmem:[#allocation5 + $0x28] sm:$0xff] %v82
      %89 = vst [vmem:[#allocation5 + $0x30] sm:$0xff] %v82
      %90 = vst [vmem:[#allocation5 + $0x38] sm:$0xff] %v82
      %91 = vst [vmem:[#allocation5 + $0x40] sm:$0xff] %v82
      %92 = vst [vmem:[#allocation5 + $0x48] sm:$0xff] %v82
      %93 = vst [vmem:[#allocation5 + $0x50] sm:$0xff] %v82
      %94 = vst [vmem:[#allocation5 + $0x58] sm:$0xff] %v82
      %95 = vst [vmem:[#allocation5 + $0x60] sm:$0xff] %v82
      %96 = vst [vmem:[#allocation5 + $0x68] sm:$0xff] %v82
      %97 = vst [vmem:[#allocation5 + $0x70] sm:$0xff] %v82
      %98 = vst [vmem:[#allocation5 + $0x78] sm:$0xff] %v82
    $region21: #{tpu_custom_call.1} parent=1 // pred_fallthru
      _
    %s99 = sld [smem:[#allocation4]]
    %p100 = scmp.lt.s32.totalorder 0, %s99
    // Predicated region
    $region22: #{tpu_custom_call.1} parent=1 // pred_check
      %p101 = pneg %p100
    $region23: #{tpu_custom_call.1} parent=1 // pred_check_branch
      %103 = sbr.rel (%p101) target = $region25
    $region24: #{tpu_custom_call.1} parent=1 // pred_region
      %v104 = vld [vmem:[%s59] sm:$0xff]
      %v105 = vld [vmem:[%s59 + $0x8] sm:$0xff]
      %v106 = vld [vmem:[%s59 + $0x10] sm:$0xff]
      %v107 = vld [vmem:[%s59 + $0x18] sm:$0xff]
      %v108 = vld [vmem:[%s59 + $0x20] sm:$0xff]
      %v109 = vld [vmem:[%s59 + $0x28] sm:$0xff]
      %v110 = vld [vmem:[%s59 + $0x30] sm:$0xff]
      %v111 = vld [vmem:[%s59 + $0x38] sm:$0xff]
      %v112 = vld [vmem:[%s59 + $0x40] sm:$0xff]
      %v113 = vld [vmem:[%s59 + $0x48] sm:$0xff]
      %v114 = vld [vmem:[%s59 + $0x50] sm:$0xff]
      %v115 = vld [vmem:[%s59 + $0x58] sm:$0xff]
      %v116 = vld [vmem:[%s59 + $0x60] sm:$0xff]
      %v117 = vld [vmem:[%s59 + $0x68] sm:$0xff]
      %v118 = vld [vmem:[%s59 + $0x70] sm:$0xff]
      %v119 = vld [vmem:[%s59 + $0x78] sm:$0xff]
      %v120 = vld [vmem:[%s3] sm:$0xff]
      %v121 = vld [vmem:[%s3 + $0x8] sm:$0xff]
      %v122 = vld [vmem:[%s3 + $0x10] sm:$0xff]
      %v123 = vld [vmem:[%s3 + $0x18] sm:$0xff]
      %vm124 = vcmask 261120
      %v126 = vsel %vm124, %v104, 0
      %v129 = vsel %vm124, %v105, 0
      %v132 = vsel %vm124, %v106, 0
      %v135 = vsel %vm124, %v107, 0
      %v138 = vsel %vm124, %v108, 0
      %v141 = vsel %vm124, %v109, 0
      %v144 = vsel %vm124, %v110, 0
      %v147 = vsel %vm124, %v111, 0
      %v150 = vsel %vm124, %v112, 0
      %v153 = vsel %vm124, %v113, 0
      %v156 = vsel %vm124, %v114, 0
      %v159 = vsel %vm124, %v115, 0
      %v162 = vsel %vm124, %v116, 0
      %v165 = vsel %vm124, %v117, 0
      %v168 = vsel %vm124, %v118, 0
      %v171 = vsel %vm124, %v119, 0
      %173 = vmatprep.subr.mxu0 0.0
      %174 = vmatpush1.msra.mxu0 %v120
      %175 = vmatprep.subr.mxu0 0.0
      %176 = vmatpush1.msra.mxu0 %v121
      %177 = vmatprep.subr.mxu0 0.0
      %178 = vmatpush1.msra.mxu0 %v122
      %179 = vmatprep.subr.mxu0 0.0
      %180 = vmatpush1.msra.mxu0 %v123
      %181 = vmatprep.subr.mxu0 0.0
      %182 = vmatpush1.msra.mxu0 0.0
      %183 = vmatprep.subr.mxu0 0.0
      %184 = vmatpush1.msra.mxu0 0.0
      %185 = vmatprep.subr.mxu0 0.0
      %186 = vmatpush1.msra.mxu0 0.0
      %187 = vmatprep.subr.mxu0 0.0
      %188 = vmatpush1.msra.mxu0 0.0
      %189 = vmatprep.subr.mxu0 0.0
      %190 = vmatpush1.msra.mxu0 0.0
      %191 = vmatprep.subr.mxu0 0.0
      %192 = vmatpush1.msra.mxu0 0.0
      %193 = vmatprep.subr.mxu0 0.0
      %194 = vmatpush1.msra.mxu0 0.0
      %195 = vmatprep.subr.mxu0 0.0
      %196 = vmatpush1.msra.mxu0 0.0
      %197 = vmatprep.subr.mxu0 0.0
      %198 = vmatpush1.msra.mxu0 0.0
      %199 = vmatprep.subr.mxu0 0.0
      %200 = vmatpush1.msra.mxu0 0.0
      %201 = vmatprep.subr.mxu0 0.0
      %202 = vmatpush1.msra.mxu0 0.0
      %203 = vmatprep.subr.mxu0 0.0
      %204 = vmatpush1.msra.mxu0 0.0
      %205 = vmatprep.subr.mxu0 0.0
      %206 = vmatpush1.msra.mxu0 0.0
      %207 = vmatprep.subr.mxu0 0.0
      %208 = vmatpush1.msra.mxu0 0.0
      %209 = vmatprep.subr.mxu0 0.0
      %210 = vmatpush1.msra.mxu0 0.0
      %211 = vmatprep.subr.mxu0 0.0
      %212 = vmatpush1.msra.mxu0 0.0
      %213 = vmatprep.subr.mxu0 0.0
      %214 = vmatpush1.msra.mxu0 0.0
      %215 = vmatprep.subr.mxu0 0.0
      %216 = vmatpush1.msra.mxu0 0.0
      %217 = vmatprep.subr.mxu0 0.0
      %218 = vmatpush1.msra.mxu0 0.0
      %219 = vmatprep.subr.mxu0 0.0
      %220 = vmatpush1.msra.mxu0 0.0
      %221 = vmatprep.subr.mxu0 0.0
      %222 = vmatpush1.msra.mxu0 0.0
      %223 = vmatprep.subr.mxu0 0.0
      %224 = vmatpush1.msra.mxu0 0.0
      %225 = vmatprep.subr.mxu0 0.0
      %226 = vmatpush1.msra.mxu0 0.0
      %227 = vmatprep.subr.mxu0 0.0
      %228 = vmatpush1.msra.mxu0 0.0
      %229 = vmatprep.subr.mxu0 0.0
      %230 = vmatpush1.msra.mxu0 0.0
      %231 = vmatprep.subr.mxu0 0.0
      %232 = vmatpush1.msra.mxu0 0.0
      %233 = vmatprep.subr.mxu0 0.0
      %234 = vmatpush1.msra.mxu0 0.0
      %235 = vmatprep.subr.mxu0 0.0
      %236 = vmatpush1.msra.mxu0 0.0
      %237 = vmatprep.mubr.f32.mxu0 0.0
      %238 = vmatmul.mubr.f32.gmra.mrb[0].mxu0 %v126
      %v239 = vpop.f32.mrb[0].mxu0
      %v240 = vadd.f32 0.0, %v239
      %v241 = vpop.f32.mrb[0].mxu0
      %242 = vmatprep.mubr.f32.mxu0 0.0
      %243 = vmatmul.mubr.f32.gmra.mrb[0].mxu0 %v129
      %v244 = vpop.f32.mrb[0].mxu0
      %v245 = vadd.f32 0.0, %v244
      %v246 = vpop.f32.mrb[0].mxu0
      %247 = vmatprep.mubr.f32.mxu0 0.0
      %248 = vmatmul.mubr.f32.gmra.mrb[0].mxu0 %v132
      %v249 = vpop.f32.mrb[0].mxu0
      %v250 = vadd.f32 0.0, %v249
      %v251 = vpop.f32.mrb[0].mxu0
      %252 = vmatprep.mubr.f32.mxu0 0.0
      %253 = vmatmul.mubr.f32.gmra.mrb[0].mxu0 %v135
      %v254 = vpop.f32.mrb[0].mxu0
      %v255 = vadd.f32 0.0, %v254
      %v256 = vpop.f32.mrb[0].mxu0
      %257 = vmatprep.mubr.f32.mxu0 0.0
      %258 = vmatmul.mubr.f32.gmra.mrb[0].mxu0 %v138
      %v259 = vpop.f32.mrb[0].mxu0
      %v260 = vadd.f32 0.0, %v259
      %v261 = vpop.f32.mrb[0].mxu0
      %262 = vmatprep.mubr.f32.mxu0 0.0
      %263 = vmatmul.mubr.f32.gmra.mrb[0].mxu0 %v141
      %v264 = vpop.f32.mrb[0].mxu0
      %v265 = vadd.f32 0.0, %v264
      %v266 = vpop.f32.mrb[0].mxu0
      %267 = vmatprep.mubr.f32.mxu0 0.0
      %268 = vmatmul.mubr.f32.gmra.mrb[0].mxu0 %v144
      %v269 = vpop.f32.mrb[0].mxu0
      %v270 = vadd.f32 0.0, %v269
      %v271 = vpop.f32.mrb[0].mxu0
      %272 = vmatprep.mubr.f32.mxu0 0.0
      %273 = vmatmul.mubr.f32.gmra.mrb[0].mxu0 %v147
      %v274 = vpop.f32.mrb[0].mxu0
      %v275 = vadd.f32 0.0, %v274
      %v276 = vpop.f32.mrb[0].mxu0
      %277 = vmatprep.mubr.f32.mxu0 0.0
      %278 = vmatmul.mubr.f32.gmra.mrb[0].mxu0 %v150
      %v279 = vpop.f32.mrb[0].mxu0
      %v280 = vadd.f32 0.0, %v279
      %v281 = vpop.f32.mrb[0].mxu0
      %282 = vmatprep.mubr.f32.mxu0 0.0
      %283 = vmatmul.mubr.f32.gmra.mrb[0].mxu0 %v153
      %v284 = vpop.f32.mrb[0].mxu0
      %v285 = vadd.f32 0.0, %v284
      %v286 = vpop.f32.mrb[0].mxu0
      %287 = vmatprep.mubr.f32.mxu0 0.0
      %288 = vmatmul.mubr.f32.gmra.mrb[0].mxu0 %v156
      %v289 = vpop.f32.mrb[0].mxu0
      %v290 = vadd.f32 0.0, %v289
      %v291 = vpop.f32.mrb[0].mxu0
      %292 = vmatprep.mubr.f32.mxu0 0.0
      %293 = vmatmul.mubr.f32.gmra.mrb[0].mxu0 %v159
      %v294 = vpop.f32.mrb[0].mxu0
      %v295 = vadd.f32 0.0, %v294
      %v296 = vpop.f32.mrb[0].mxu0
      %297 = vmatprep.mubr.f32.mxu0 0.0
      %298 = vmatmul.mubr.f32.gmra.mrb[0].mxu0 %v162
      %v299 = vpop.f32.mrb[0].mxu0
      %v300 = vadd.f32 0.0, %v299
      %v301 = vpop.f32.mrb[0].mxu0
      %302 = vmatprep.mubr.f32.mxu0 0.0
      %303 = vmatmul.mubr.f32.gmra.mrb[0].mxu0 %v165
      %v304 = vpop.f32.mrb[0].mxu0
      %v305 = vadd.f32 0.0, %v304
      %v306 = vpop.f32.mrb[0].mxu0
      %307 = vmatprep.mubr.f32.mxu0 0.0
      %308 = vmatmul.mubr.f32.gmra.mrb[0].mxu0 %v168
      %v309 = vpop.f32.mrb[0].mxu0
      %v310 = vadd.f32 0.0, %v309
      %v311 = vpop.f32.mrb[0].mxu0
      %312 = vmatprep.mubr.f32.mxu0 0.0
      %313 = vmatmul.mubr.f32.gmra.mrb[0].mxu0 %v171
      %v314 = vpop.f32.mrb[0].mxu0
      %v315 = vadd.f32 0.0, %v314
      %v316 = vpop.f32.mrb[0].mxu0
      %317 = vdwg.mxu0
      %v318 = vld [vmem:[#allocation5] sm:$0xff]
      %v319 = vld [vmem:[#allocation5 + $0x8] sm:$0xff]
      %v320 = vld [vmem:[#allocation5 + $0x10] sm:$0xff]
      %v321 = vld [vmem:[#allocation5 + $0x18] sm:$0xff]
      %v322 = vld [vmem:[#allocation5 + $0x20] sm:$0xff]
      %v323 = vld [vmem:[#allocation5 + $0x28] sm:$0xff]
      %v324 = vld [vmem:[#allocation5 + $0x30] sm:$0xff]
      %v325 = vld [vmem:[#allocation5 + $0x38] sm:$0xff]
      %v326 = vld [vmem:[#allocation5 + $0x40] sm:$0xff]
      %v327 = vld [vmem:[#allocation5 + $0x48] sm:$0xff]
      %v328 = vld [vmem:[#allocation5 + $0x50] sm:$0xff]
      %v329 = vld [vmem:[#allocation5 + $0x58] sm:$0xff]
      %v330 = vld [vmem:[#allocation5 + $0x60] sm:$0xff]
      %v331 = vld [vmem:[#allocation5 + $0x68] sm:$0xff]
      %v332 = vld [vmem:[#allocation5 + $0x70] sm:$0xff]
      %v333 = vld [vmem:[#allocation5 + $0x78] sm:$0xff]
      %v334 = vld [vmem:[%s68] sm:$0xff]
      %v335 = vld [vmem:[%s68 + $0x8] sm:$0xff]
      %v336 = vld [vmem:[%s68 + $0x10] sm:$0xff]
      %v337 = vld [vmem:[%s68 + $0x18] sm:$0xff]
      %v338 = vld [vmem:[%s68 + $0x20] sm:$0xff]
      %v339 = vld [vmem:[%s68 + $0x28] sm:$0xff]
      %v340 = vld [vmem:[%s68 + $0x30] sm:$0xff]
      %v341 = vld [vmem:[%s68 + $0x38] sm:$0xff]
      %v342 = vld [vmem:[%s68 + $0x40] sm:$0xff]
      %v343 = vld [vmem:[%s68 + $0x48] sm:$0xff]
      %v344 = vld [vmem:[%s68 + $0x50] sm:$0xff]
      %v345 = vld [vmem:[%s68 + $0x58] sm:$0xff]
      %v346 = vld [vmem:[%s68 + $0x60] sm:$0xff]
      %v347 = vld [vmem:[%s68 + $0x68] sm:$0xff]
      %v348 = vld [vmem:[%s68 + $0x70] sm:$0xff]
      %v349 = vld [vmem:[%s68 + $0x78] sm:$0xff]
      %350 = vmatprep.subr.mxu0 0.0
      %351 = vmatpush1.msra.mxu0 %v240
      %352 = vmatprep.subr.mxu0 0.0
      %353 = vmatpush1.msra.mxu0 %v245
      %354 = vmatprep.subr.mxu0 0.0
      %355 = vmatpush1.msra.mxu0 %v250
      %356 = vmatprep.subr.mxu0 0.0
      %357 = vmatpush1.msra.mxu0 %v255
      %358 = vmatprep.subr.mxu0 0.0
      %359 = vmatpush1.msra.mxu0 %v260
      %360 = vmatprep.subr.mxu0 0.0
      %361 = vmatpush1.msra.mxu0 %v265
      %362 = vmatprep.subr.mxu0 0.0
      %363 = vmatpush1.msra.mxu0 %v270
      %364 = vmatprep.subr.mxu0 0.0
      %365 = vmatpush1.msra.mxu0 %v275
      %366 = vmatprep.subr.mxu0 0.0
      %367 = vmatpush1.msra.mxu0 %v280
      %368 = vmatprep.subr.mxu0 0.0
      %369 = vmatpush1.msra.mxu0 %v285
      %370 = vmatprep.subr.mxu0 0.0
      %371 = vmatpush1.msra.mxu0 %v290
      %372 = vmatprep.subr.mxu0 0.0
      %373 = vmatpush1.msra.mxu0 %v295
      %374 = vmatprep.subr.mxu0 0.0
      %375 = vmatpush1.msra.mxu0 %v300
      %376 = vmatprep.subr.mxu0 0.0
      %377 = vmatpush1.msra.mxu0 %v305
      %378 = vmatprep.subr.mxu0 0.0
      %379 = vmatpush1.msra.mxu0 %v310
      %380 = vmatprep.subr.mxu0 0.0
      %381 = vmatpush1.msra.mxu0 %v315
      %382 = vmatprep.subr.mxu0 0.0
      %383 = vmatpush1.msra.mxu0 0.0
      %384 = vmatprep.subr.mxu0 0.0
      %385 = vmatpush1.msra.mxu0 0.0
      %386 = vmatprep.subr.mxu0 0.0
      %387 = vmatpush1.msra.mxu0 0.0
      %388 = vmatprep.subr.mxu0 0.0
      %389 = vmatpush1.msra.mxu0 0.0
      %390 = vmatprep.subr.mxu0 0.0
      %391 = vmatpush1.msra.mxu0 0.0
      %392 = vmatprep.subr.mxu0 0.0
      %393 = vmatpush1.msra.mxu0 0.0
      %394 = vmatprep.subr.mxu0 0.0
      %395 = vmatpush1.msra.mxu0 0.0
      %396 = vmatprep.subr.mxu0 0.0
      %397 = vmatpush1.msra.mxu0 0.0
      %398 = vmatprep.subr.mxu0 0.0
      %399 = vmatpush1.msra.mxu0 0.0
      %400 = vmatprep.subr.mxu0 0.0
      %401 = vmatpush1.msra.mxu0 0.0
      %402 = vmatprep.subr.mxu0 0.0
      %403 = vmatpush1.msra.mxu0 0.0
      %404 = vmatprep.subr.mxu0 0.0
      %405 = vmatpush1.msra.mxu0 0.0
      %406 = vmatprep.subr.mxu0 0.0
      %407 = vmatpush1.msra.mxu0 0.0
      %408 = vmatprep.subr.mxu0 0.0
      %409 = vmatpush1.msra.mxu0 0.0
      %410 = vmatprep.subr.mxu0 0.0
      %411 = vmatpush1.msra.mxu0 0.0
      %412 = vmatprep.subr.mxu0 0.0
      %413 = vmatpush1.msra.mxu0 0.0
      %414 = vmatprep.mubr.f32.mxu0 0.0
      %415 = vmatmul.mubr.f32.gmra.mrb[0].mxu0 %v334
      %v416 = vpop.f32.mrb[0].mxu0
      %v417 = vadd.f32 0.0, %v416
      %v418 = vpop.f32.mrb[0].mxu0
      %419 = vmatprep.mubr.f32.mxu0 0.0
      %420 = vmatmul.mubr.f32.gmra.mrb[0].mxu0 %v335
      %v421 = vpop.f32.mrb[0].mxu0
      %v422 = vadd.f32 0.0, %v421
      %v423 = vpop.f32.mrb[0].mxu0
      %424 = vmatprep.mubr.f32.mxu0 0.0
      %425 = vmatmul.mubr.f32.gmra.mrb[0].mxu0 %v336
      %v426 = vpop.f32.mrb[0].mxu0
      %v427 = vadd.f32 0.0, %v426
      %v428 = vpop.f32.mrb[0].mxu0
      %429 = vmatprep.mubr.f32.mxu0 0.0
      %430 = vmatmul.mubr.f32.gmra.mrb[0].mxu0 %v337
      %v431 = vpop.f32.mrb[0].mxu0
      %v432 = vadd.f32 0.0, %v431
      %v433 = vpop.f32.mrb[0].mxu0
      %434 = vmatprep.mubr.f32.mxu0 0.0
      %435 = vmatmul.mubr.f32.gmra.mrb[0].mxu0 %v338
      %v436 = vpop.f32.mrb[0].mxu0
      %v437 = vadd.f32 0.0, %v436
      %v438 = vpop.f32.mrb[0].mxu0
      %439 = vmatprep.mubr.f32.mxu0 0.0
      %440 = vmatmul.mubr.f32.gmra.mrb[0].mxu0 %v339
      %v441 = vpop.f32.mrb[0].mxu0
      %v442 = vadd.f32 0.0, %v441
      %v443 = vpop.f32.mrb[0].mxu0
      %444 = vmatprep.mubr.f32.mxu0 0.0
      %445 = vmatmul.mubr.f32.gmra.mrb[0].mxu0 %v340
      %v446 = vpop.f32.mrb[0].mxu0
      %v447 = vadd.f32 0.0, %v446
      %v448 = vpop.f32.mrb[0].mxu0
      %449 = vmatprep.mubr.f32.mxu0 0.0
      %450 = vmatmul.mubr.f32.gmra.mrb[0].mxu0 %v341
      %v451 = vpop.f32.mrb[0].mxu0
      %v452 = vadd.f32 0.0, %v451
      %v453 = vpop.f32.mrb[0].mxu0
      %454 = vmatprep.mubr.f32.mxu0 0.0
      %455 = vmatmul.mubr.f32.gmra.mrb[0].mxu0 %v342
      %v456 = vpop.f32.mrb[0].mxu0
      %v457 = vadd.f32 0.0, %v456
      %v458 = vpop.f32.mrb[0].mxu0
      %459 = vmatprep.mubr.f32.mxu0 0.0
      %460 = vmatmul.mubr.f32.gmra.mrb[0].mxu0 %v343
      %v461 = vpop.f32.mrb[0].mxu0
      %v462 = vadd.f32 0.0, %v461
      %v463 = vpop.f32.mrb[0].mxu0
      %464 = vmatprep.mubr.f32.mxu0 0.0
      %465 = vmatmul.mubr.f32.gmra.mrb[0].mxu0 %v344
      %v466 = vpop.f32.mrb[0].mxu0
      %v467 = vadd.f32 0.0, %v466
      %v468 = vpop.f32.mrb[0].mxu0
      %469 = vmatprep.mubr.f32.mxu0 0.0
      %470 = vmatmul.mubr.f32.gmra.mrb[0].mxu0 %v345
      %v471 = vpop.f32.mrb[0].mxu0
      %v472 = vadd.f32 0.0, %v471
      %v473 = vpop.f32.mrb[0].mxu0
      %474 = vmatprep.mubr.f32.mxu0 0.0
      %475 = vmatmul.mubr.f32.gmra.mrb[0].mxu0 %v346
      %v476 = vpop.f32.mrb[0].mxu0
      %v477 = vadd.f32 0.0, %v476
      %v478 = vpop.f32.mrb[0].mxu0
      %479 = vmatprep.mubr.f32.mxu0 0.0
      %480 = vmatmul.mubr.f32.gmra.mrb[0].mxu0 %v347
      %v481 = vpop.f32.mrb[0].mxu0
      %v482 = vadd.f32 0.0, %v481
      %v483 = vpop.f32.mrb[0].mxu0
      %484 = vmatprep.mubr.f32.mxu0 0.0
      %485 = vmatmul.mubr.f32.gmra.mrb[0].mxu0 %v348
      %v486 = vpop.f32.mrb[0].mxu0
      %v487 = vadd.f32 0.0, %v486
      %v488 = vpop.f32.mrb[0].mxu0
      %489 = vmatprep.mubr.f32.mxu0 0.0
      %490 = vmatmul.mubr.f32.gmra.mrb[0].mxu0 %v349
      %v491 = vpop.f32.mrb[0].mxu0
      %v492 = vadd.f32 0.0, %v491
      %v493 = vpop.f32.mrb[0].mxu0
      %494 = vdwg.mxu0
      %v495 = vadd.f32 %v318, %v417
      %v496 = vadd.f32 %v319, %v422
      %v497 = vadd.f32 %v320, %v427
      %v498 = vadd.f32 %v321, %v432
      %v499 = vadd.f32 %v322, %v437
      %v500 = vadd.f32 %v323, %v442
      %v501 = vadd.f32 %v324, %v447
      %v502 = vadd.f32 %v325, %v452
      %v503 = vadd.f32 %v326, %v457
      %v504 = vadd.f32 %v327, %v462
      %v505 = vadd.f32 %v328, %v467
      %v506 = vadd.f32 %v329, %v472
      %v507 = vadd.f32 %v330, %v477
      %v508 = vadd.f32 %v331, %v482
      %v509 = vadd.f32 %v332, %v487
      %v510 = vadd.f32 %v333, %v492
      %511 = vst [vmem:[#allocation5] sm:$0xff] %v495
      %512 = vst [vmem:[#allocation5 + $0x8] sm:$0xff] %v496
      %513 = vst [vmem:[#allocation5 + $0x10] sm:$0xff] %v497
      %514 = vst [vmem:[#allocation5 + $0x18] sm:$0xff] %v498
      %515 = vst [vmem:[#allocation5 + $0x20] sm:$0xff] %v499
      %516 = vst [vmem:[#allocation5 + $0x28] sm:$0xff] %v500
      %517 = vst [vmem:[#allocation5 + $0x30] sm:$0xff] %v501
      %518 = vst [vmem:[#allocation5 + $0x38] sm:$0xff] %v502
      %519 = vst [vmem:[#allocation5 + $0x40] sm:$0xff] %v503
      %520 = vst [vmem:[#allocation5 + $0x48] sm:$0xff] %v504
      %521 = vst [vmem:[#allocation5 + $0x50] sm:$0xff] %v505
      %522 = vst [vmem:[#allocation5 + $0x58] sm:$0xff] %v506
      %523 = vst [vmem:[#allocation5 + $0x60] sm:$0xff] %v507
      %524 = vst [vmem:[#allocation5 + $0x68] sm:$0xff] %v508
      %525 = vst [vmem:[#allocation5 + $0x70] sm:$0xff] %v509
      %526 = vst [vmem:[#allocation5 + $0x78] sm:$0xff] %v510
    $region25: #{tpu_custom_call.1} parent=1 // pred_fallthru
      _
    // Predicated region
    $region26: #{tpu_custom_call.1} parent=1 // pred_check
      _
    $region27: #{tpu_custom_call.1} parent=1 // pred_check_branch
      %528 = sbr.rel (0) target = $region29
    $region28: #{tpu_custom_call.1} parent=1 // pred_region
      %s530 = ssub.s32 2048, 2048
      %531 = vsyncadd [#allocation6], %s530
      %s532 = sshll.u32 [#allocation5], 4
      %s533 = int_to_ptr.vmem [resolvable:$true] %s532
      %538 = dma.vmem_to_hbm [thread:$0]  %s533, 2048, %s6, [#allocation6], 128, 128, 8
    $region29: #{tpu_custom_call.1} parent=1 // pred_fallthru
      _
    // Predicated region
    $region30: #{tpu_custom_call.1} parent=1 // pred_check
      _
    $region31: #{tpu_custom_call.1} parent=1 // pred_check_branch
      %540 = sbr.rel (0) target = $region33
    $region32: #{tpu_custom_call.1} parent=1 // pred_region
      %541 = dma.done [#allocation6], 2048
    $region33: #{tpu_custom_call.1} parent=1 // pred_fallthru
      _
    %542 = vsyncpa [#allocation6], 1

</llo_original>
